<compile_context>
chip_gen: v7x
topology: tpu7x:2x2x1
jax: 0.10.0
libtpu: 0.0.40
codegen_flags: <defaults>
</compile_context>

<pallas_src>
import math

import jax
import jax.numpy as jnp
from jax.experimental import pallas as pl
from jax.experimental.pallas import tpu as pltpu


def token_embed_kernel(x_ref, w_ref, o_ref):
    # x_ref: (Mt, 3C)   w_ref: (3C, D)   o_ref: (Mt, D)
    o_ref[...] = jnp.dot(
        x_ref[...], w_ref[...], preferred_element_type=jnp.float32
    ).astype(o_ref.dtype)


def _pad(v, m):
    return ((v + m - 1) // m) * m


def _pick_row_block(m_rows, target_rows=2048, min_steps=4):
    """Pick a row-block size: divisor of m_rows, multiple of 8, <= target_rows if possible,
    while trying to keep at least `min_steps` grid steps (>=2*num_cores for megacore)."""
    divs = [d for d in range(8, m_rows + 1, 8) if m_rows % d == 0]
    if not divs:
        return m_rows  # too small / awkward to tile: single full-extent block
    for steps in (min_steps, 2, 1):
        eligible = [d for d in divs if m_rows // d >= steps]
        if eligible:
            under = [d for d in eligible if d <= target_rows]
            return max(under) if under else min(eligible)
    return m_rows


def token_embedding(x, w_torch, *, target_rows_per_step=2048):
    """x: (B, L, c_in); w_torch: (d_model, c_in, 3) torch Conv1d layout -> (B, L, d_model)."""
    B, L, C = x.shape
    D = w_torch.shape[0]
    assert w_torch.shape == (D, C, 3)

    # Fold the 3 taps into a single (3C, D) matmul operand (done once, outside the kernel).
    # Row k*C + c of w_fused is w_torch[:, c, k], matching x_cat's lane order [prev | cur | next].
    w_fused = jnp.transpose(w_torch, (2, 1, 0)).reshape(3 * C, D).astype(x.dtype)

    # Build the 3-tap concatenation in the wrapper (cheap: C << D) and flatten rows.
    # x_cat[b, t] = [x[b, t-1] | x[b, t] | x[b, t+1]]  (circular)
    x_cat = jnp.concatenate(
        [jnp.roll(x, 1, axis=1), x, jnp.roll(x, -1, axis=1)], axis=-1
    ).reshape(B * L, 3 * C)

    M = B * L
    Mt = _pick_row_block(M, target_rows_per_step)
    grid = (M // Mt,)

    # VMEM estimate with lane/sublane padding: in/out blocks double-buffered, weight
    # resident (count 2x to be safe), plus the f32 accumulator for sub-32-bit dtypes.
    itemsize = jnp.dtype(x.dtype).itemsize
    in_blk = _pad(Mt, 8) * _pad(3 * C, 128) * itemsize
    w_blk = _pad(3 * C, 8) * _pad(D, 128) * itemsize
    out_blk = _pad(Mt, 8) * _pad(D, 128) * itemsize
    acc_blk = _pad(Mt, 8) * _pad(D, 128) * 4 if itemsize < 4 else 0
    est_vmem = 2 * (in_blk + out_blk + w_blk) + acc_blk + (1 << 20)

    try:
        vmem_cap = pltpu.get_tpu_info().vmem_capacity_bytes
    except Exception:
        vmem_cap = 64 * 1024 * 1024  # conservative (v7x per-TC physical VMEM)
    vmem_budget = int(vmem_cap * 0.75)  # leave headroom for compiler internal scratch

    cparams = {"dimension_semantics": ("parallel",)}
    if est_vmem > 16 * 1024 * 1024:  # only raise the scoped limit when large blocks need it
        cparams["vmem_limit_bytes"] = int(min(est_vmem, vmem_budget))

    out_flat = pl.pallas_call(
        token_embed_kernel,
        out_shape=jax.ShapeDtypeStruct((M, D), x.dtype),
        grid_spec=pltpu.PrefetchScalarGridSpec(
            num_scalar_prefetch=0,
            grid=grid,
            in_specs=[
                pl.BlockSpec((Mt, 3 * C), lambda i: (i, 0)),
                pl.BlockSpec((3 * C, D), lambda i: (0, 0)),
            ],
            out_specs=pl.BlockSpec((Mt, D), lambda i: (i, 0)),
        ),
        compiler_params=pltpu.CompilerParams(**cparams),
    )(x_cat, w_fused)

    return out_flat.reshape(B, L, D)


def token_embedding_ref(x, w_torch):
    """Pure-JAX reference of circular Conv1d(k=3, pad=1, no bias) in channels-last layout."""
    out = jnp.zeros(x.shape[:2] + (w_torch.shape[0],), dtype=jnp.float32)
    for k in range(3):
        out = out + jnp.einsum("blc,dc->bld", jnp.roll(x, 1 - k, axis=1), w_torch[:, :, k])
    return out


if __name__ == "__main__":
    B, L, c_in, d_model = 2, 8, 4, 32

    key = jax.random.PRNGKey(0)
    kx, kw = jax.random.split(key)

    # Input sequence, matching the torch forward input x: (batch, seq_len, c_in)
    x = jax.random.normal(kx, (B, L, c_in), dtype=jnp.float32)

    # Deterministic kaiming_normal_(mode='fan_in', nonlinearity='leaky_relu') init
    # for the Conv1d weight of shape (d_model, c_in, 3): fan_in = c_in * 3.
    fan_in = c_in * 3
    gain = math.sqrt(2.0 / (1.0 + 0.01 ** 2))
    std = gain / math.sqrt(fan_in)
    w_torch = std * jax.random.normal(kw, (d_model, c_in, 3), dtype=jnp.float32)

    out = jax.block_until_ready(token_embedding(x, w_torch))
    ref = token_embedding_ref(x, w_torch)

    assert out.shape == (B, L, d_model)
    assert jnp.allclose(out, ref, atol=1e-5, rtol=1e-5)

    print("KERNEL_OK")
</pallas_src>

<mosaic_0001>
module attributes {stable_mosaic.version = 11 : i64} {
  func.func @token_embed_kernel(%arg0: i32, %arg1: memref<8x12xf32, #tpu.memory_space<vmem>>, %arg2: memref<12x32xf32, #tpu.memory_space<vmem>>, %arg3: memref<8x32xf32, #tpu.memory_space<vmem>>) attributes {dimension_semantics = [#tpu.dimension_semantics<parallel>], iteration_bounds = array<i64: 2>, scalar_prefetch = 0 : i64, scratch_operands = 0 : i64, tpu.core_type = #tpu.core_type<tc>, window_params = [{transform_indices = @transform_0, window_bounds = array<i64: 8, 12>}, {pipeline_mode = #tpu.pipeline_mode<synchronous>, transform_indices = @transform_1, window_bounds = array<i64: 12, 32>}, {transform_indices = @transform_2, window_bounds = array<i64: 8, 32>}]} {
    %c0 = arith.constant 0 : index
    %c0_0 = arith.constant 0 : index
    %0 = vector.load %arg1[%c0, %c0_0] : memref<8x12xf32, #tpu.memory_space<vmem>>, vector<8x12xf32>
    %c0_1 = arith.constant 0 : index
    %c0_2 = arith.constant 0 : index
    %1 = vector.load %arg2[%c0_1, %c0_2] : memref<12x32xf32, #tpu.memory_space<vmem>>, vector<12x32xf32>
    %cst = arith.constant dense<0.000000e+00> : vector<8x32xf32>
    %2 = tpu.matmul %0, %1, %cst {dimension_numbers = #tpu.dot_dimension_numbers<[1], [0], [0], [1], [0, 0, 1, 1], [], []>} : vector<8x12xf32>, vector<12x32xf32>, vector<8x32xf32> -> vector<8x32xf32>
    %c0_3 = arith.constant 0 : index
    %c0_4 = arith.constant 0 : index
    %3 = vector.load %arg3[%c0_3, %c0_4] : memref<8x32xf32, #tpu.memory_space<vmem>>, vector<8x32xf32>
    tpu.vector_store %arg3[%c0_3, %c0_4], %2 {strides = array<i32>} : memref<8x32xf32, #tpu.memory_space<vmem>>, vector<8x32xf32>,
    return
  }
  func.func @transform_0(%arg0: i32) -> (i32, i32) {
    %c0_i32 = arith.constant 0 : i32
    %c0_i32_0 = arith.constant 0 : i32
    return %arg0, %c0_i32 : i32, i32
  }
  func.func @transform_1(%arg0: i32) -> (i32, i32) {
    %c0_i32 = arith.constant 0 : i32
    %c0_i32_0 = arith.constant 0 : i32
    %c0_i32_1 = arith.constant 0 : i32
    return %c0_i32, %c0_i32_0 : i32, i32
  }
  func.func @transform_2(%arg0: i32) -> (i32, i32) {
    %c0_i32 = arith.constant 0 : i32
    %c0_i32_0 = arith.constant 0 : i32
    return %arg0, %c0_i32 : i32, i32
  }
}

</mosaic_0001>

<llo_original>
// kernel: tpu_custom_call.1
$region0: #{tpu_custom_call.1}
  #allocation0 [shape = 'u32[]', space=smem, size = 0x4, offset = 0x4, fixed_abs, tag = 'smem constant byte address 0x4 - core index']
  #allocation1 [shape = 'u32[144,128]{1,0:T(1,128)}', space=vmem, size = 0x12000, scoped, tag = 'internal scratch']
  %s0 = inlined_call_operand.hbm [shape: f32[16,12], index: 0, kind: input, shape index: {}]
  %s1 = inlined_call_operand.hbm [shape: f32[12,32], index: 1, kind: input, shape index: {}]
  %s2 = inlined_call_operand.hbm [shape: f32[16,32], index: 2, kind: output, shape index: {}]
  %s3 = sld [smem:[#allocation0]]
  $region49: #{tpu_custom_call.1} parent=0
    _
  %s5 = ssub.s32 1, %s3
  %s6 = scalar_select 0, %s5, %s3
  $region1: #{tpu_custom_call.1} parent=0
    #allocation2 [shape = 'u8[8192]{0}', space=vmem, size = 0x2000, scoped, tag = 'input window, operand 0']
    #allocation3 [shape = 's32[2]{0}', space=sflag, size = 0x8, scoped, tag = 'scoped memory for tpu_custom_call.1']
    #allocation4 [shape = 's32[2]{0}', space=sflag, size = 0x8, scoped, tag = 'scoped memory for tpu_custom_call.1']
    #allocation5 [shape = 'u8[8192]{0}', space=vmem, size = 0x2000, scoped, tag = 'input window, operand 1, single buffered']
    #allocation6 [shape = 's32[1]{0}', space=sflag, size = 0x4, scoped, tag = 'scoped memory for tpu_custom_call.1']
    #allocation7 [shape = 'u8[8192]{0}', space=vmem, size = 0x2000, scoped, tag = 'output window, operand 0']
    %7 = vsyncpa [#allocation3], 0
    %s8 = scalar_lea.sflag [#allocation3], 1
    %9 = vsyncpa %s8, 0
    %10 = vsyncpa [#allocation6], 0
    %11 = vsyncpa [#allocation4], 0
    %s12 = scalar_lea.sflag [#allocation4], 1
    %13 = vsyncpa %s12, 0
    loop: start=0, step=1, limit=4
    $region2: #{tpu_custom_call.1} parent=1 // loop_pre_header
      _
    $region3: #{tpu_custom_call.1} parent=1 // loop_header
      %s15 = sphi 0, %s19
      %p16 = scmp.ge.s32.totalorder %s15, 4
      %s25 = sphi 0, %s27
      %s28 = sphi 0, %s25
      %s29 = sphi 0, %s28
      %s45 = sphi 0, %s29
      %s49 = sphi 0, %s49
      %s51 = sphi 0, %s49
      %s52 = sphi 0, %s51
      %s66 = sphi 0, %s52
      %s72 = sphi 0, %s74
      %s75 = sphi 0, %s72
      %s76 = sphi 0, %s75
      %s92 = sphi 0, %s76
    $region4: #{tpu_custom_call.1} parent=1 // loop_header_branch
      %18 = sbr.rel (%p16) target = $region8
    $region5: #{tpu_custom_call.1} parent=1 // loop_body
      %s20 = ssub.s32 %s15, 1
      %s21 = ssub.s32 %s15, 2
      %s22 = sadd.s32 %s15, 1
      %s23 = ssub.s32 %s15, %s22
      %p24 = scmp.eq.s32.totalorder %s23, 0
      %s26 = sadd.s32 %s25, 1
      %s27 = scalar_select %p24, %s25, %s26
      %p30 = pneg %p24
      %p31 = scmp.eq.s32.totalorder %s15, 1
      %p32 = por %p30, %p31
      %p33 = scmp.ne.s32.totalorder %s25, %s28
      %p34 = scmp.eq.s32.totalorder %s15, 0
      %p35 = por %p33, %p34
      %p36 = scmp.ne.s32.totalorder %s25, %s28
      %p37 = scmp.eq.s32.totalorder %s20, 1
      %p38 = por %p36, %p37
      %p39 = scmp.ne.s32.totalorder %s28, %s29
      %p40 = scmp.eq.s32.totalorder %s20, 0
      %p41 = por %p39, %p40
      %p42 = scmp.ne.s32.totalorder %s28, %s29
      %p43 = scmp.eq.s32.totalorder %s21, 1
      %p44 = por %p42, %p43
      %p46 = scmp.ne.s32.totalorder %s29, %s45
      %p47 = scmp.eq.s32.totalorder %s21, 0
      %p48 = por %p46, %p47
      %s50 = sadd.s32 %s49, 1
      %p53 = scmp.eq.s32.totalorder %s15, 1
      %p54 = scmp.ne.s32.totalorder %s49, %s51
      %p55 = scmp.eq.s32.totalorder %s15, 0
      %p56 = por %p54, %p55
      %p57 = scmp.ne.s32.totalorder %s49, %s51
      %p58 = scmp.eq.s32.totalorder %s20, 1
      %p59 = por %p57, %p58
      %p60 = scmp.ne.s32.totalorder %s51, %s52
      %p61 = scmp.eq.s32.totalorder %s20, 0
      %p62 = por %p60, %p61
      %p63 = scmp.ne.s32.totalorder %s51, %s52
      %p64 = scmp.eq.s32.totalorder %s21, 1
      %p65 = por %p63, %p64
      %p67 = scmp.ne.s32.totalorder %s52, %s66
      %p68 = scmp.eq.s32.totalorder %s21, 0
      %p69 = por %p67, %p68
      %s70 = ssub.s32 %s15, %s22
      %p71 = scmp.eq.s32.totalorder %s70, 0
      %s73 = sadd.s32 %s72, 1
      %s74 = scalar_select %p71, %s72, %s73
      %p77 = pneg %p71
      %p78 = scmp.eq.s32.totalorder %s15, 1
      %p79 = por %p77, %p78
      %p80 = scmp.ne.s32.totalorder %s72, %s75
      %p81 = scmp.eq.s32.totalorder %s15, 0
      %p82 = por %p80, %p81
      %p83 = scmp.ne.s32.totalorder %s72, %s75
      %p84 = scmp.eq.s32.totalorder %s20, 1
      %p85 = por %p83, %p84
      %p86 = scmp.ne.s32.totalorder %s75, %s76
      %p87 = scmp.eq.s32.totalorder %s20, 0
      %p88 = por %p86, %p87
      %p89 = scmp.ne.s32.totalorder %s75, %s76
      %p90 = scmp.eq.s32.totalorder %s21, 1
      %p91 = por %p89, %p90
      %p93 = scmp.ne.s32.totalorder %s76, %s92
      %p94 = scmp.eq.s32.totalorder %s21, 0
      %p95 = por %p93, %p94
      %p96 = scmp.le.s32.totalorder 1, %s15
      %p97 = scmp.lt.s32.totalorder %s15, 3
      %p98 = pnand %p96, %p97
      %p99 = pneg %p98
      // Predicated region
      $region9: #{tpu_custom_call.1} parent=5 // pred_check
        _
      $region10: #{tpu_custom_call.1} parent=5 // pred_check_branch
        %101 = sbr.rel (%p98) target = $region12
      $region11: #{tpu_custom_call.1} parent=5 // pred_region
        %s102 = ssub.s32 %s15, 1
        // Predicated region
        $region13: #{tpu_custom_call.1} parent=11 // pred_check
          %p103 = pneg %p62
        $region14: #{tpu_custom_call.1} parent=11 // pred_check_branch
          %105 = sbr.rel (%p103) target = $region16
        $region15: #{tpu_custom_call.1} parent=11 // pred_region
          %s107 = ssub.s32 256, 256
          %108 = vsyncadd [#allocation6], %s107
          %s109 = sshll.u32 [#allocation5], 4
          %s110 = int_to_ptr.vmem [resolvable:$true] %s109
          %115 = dma.hbm_to_vmem [thread:$0]  %s1, 256, %s110, [#allocation6], 128, 128, 8
        $region16: #{tpu_custom_call.1} parent=11 // pred_fallthru
          _
      $region12: #{tpu_custom_call.1} parent=5 // pred_fallthru
        _
      %p116 = scmp.lt.s32.totalorder %s15, 2
      // Predicated region
      $region17: #{tpu_custom_call.1} parent=5 // pred_check
        %p117 = pneg %p116
      $region18: #{tpu_custom_call.1} parent=5 // pred_check_branch
        %119 = sbr.rel (%p117) target = $region20
      $region19: #{tpu_custom_call.1} parent=5 // pred_region
        // Predicated region
        $region21: #{tpu_custom_call.1} parent=19 // pred_check
          %p120 = pneg %p35
        $region22: #{tpu_custom_call.1} parent=19 // pred_check_branch
          %122 = sbr.rel (%p120) target = $region24
        $region23: #{tpu_custom_call.1} parent=19 // pred_region
          %s123 = sand.u32 %s25, 1
          %s124 = scalar_lea.sflag [#allocation3], %s123
          %s125 = sand.u32 %s25, 1
          %s126 = smul.addr %s125, 8
          %s127 = scalar_lea.vmem [#allocation2], %s126
          %s129 = ssub.s32 128, 128
          %130 = vsyncadd %s124, %s129
          %s131 = smul.addr %s15, 128
          %s132 = scalar_lea.hbm %s0, %s131
          %s134 = sshll.u32 %s127, 4
          %s135 = int_to_ptr.vmem [resolvable:$true] %s134
          %137 = dma.hbm_to_vmem [thread:$0]  %s132, 128, %s135, %s124
        $region24: #{tpu_custom_call.1} parent=19 // pred_fallthru
          _
      $region20: #{tpu_custom_call.1} parent=5 // pred_fallthru
        _
      %p138 = scmp.le.s32.totalorder 1, %s15
      %p139 = scmp.lt.s32.totalorder %s15, 3
      %p140 = pnand %p138, %p139
      %p141 = pneg %p140
      // Predicated region
      $region25: #{tpu_custom_call.1} parent=5 // pred_check
        _
      $region26: #{tpu_custom_call.1} parent=5 // pred_check_branch
        %143 = sbr.rel (%p140) target = $region28
      $region27: #{tpu_custom_call.1} parent=5 // pred_region
        %s144 = ssub.s32 %s15, 1
        %s145 = sand.u32 %s28, 1
        %s146 = scalar_lea.sflag [#allocation3], %s145
        %s147 = sand.u32 %s28, 1
        %s148 = smul.addr %s147, 8
        %s149 = scalar_lea.vmem [#allocation2], %s148
        // Predicated region
        $region29: #{tpu_custom_call.1} parent=27 // pred_check
          %p150 = pneg %p41
        $region30: #{tpu_custom_call.1} parent=27 // pred_check_branch
          %152 = sbr.rel (%p150) target = $region32
        $region31: #{tpu_custom_call.1} parent=27 // pred_region
          %153 = dma.done %s146, 128
        $region32: #{tpu_custom_call.1} parent=27 // pred_fallthru
          _
        // Predicated region
        $region33: #{tpu_custom_call.1} parent=27 // pred_check
          %p154 = pneg %p62
        $region34: #{tpu_custom_call.1} parent=27 // pred_check_branch
          %156 = sbr.rel (%p154) target = $region36
        $region35: #{tpu_custom_call.1} parent=27 // pred_region
          %157 = dma.done [#allocation6], 256
        $region36: #{tpu_custom_call.1} parent=27 // pred_fallthru
          _
        %s158 = sand.u32 %s28, 1
        %s159 = scalar_lea.sflag [#allocation3], %s158
        %s160 = sand.u32 %s28, 1
        %s161 = smul.addr %s160, 8
        %s162 = scalar_lea.vmem [#allocation2], %s161
        %p163 = pneg %p41
        %p164 = pneg %p38
        %p165 = pneg %p62
        %p166 = pneg %p59
        %p167 = pneg %p88
        %p168 = pneg %p85
        %s169 = sand.u32 %s75, 1
        %s170 = scalar_lea.sflag [#allocation4], %s169
        %s171 = sand.u32 %s75, 1
        %s172 = smul.addr %s171, 8
        %s173 = scalar_lea.vmem [#allocation7], %s172
        %v174 = vld [vmem:[%s149] sm:$0xff]
        %v175 = vld [vmem:[#allocation5] sm:$0xff]
        %v176 = vld [vmem:[#allocation5 + $0x8] sm:$0xf]
        %vm177 = vcmask 97280
        %v179 = vsel %vm177, %v174, 0
        %vm181 = vcmask 1043456
        %v183 = vsel %vm181, %v176, 0
        %185 = vmatprep.subr.mxu0 0.0
        %186 = vmatpush1.msra.mxu0 %v175
        %187 = vmatprep.subr.mxu0 0.0
        %188 = vmatpush1.msra.mxu0 %v183
        %189 = vmatprep.subr.mxu0 0.0
        %190 = vmatpush1.msra.mxu0 0.0
        %191 = vmatprep.subr.mxu0 0.0
        %192 = vmatpush1.msra.mxu0 0.0
        %193 = vmatprep.subr.mxu0 0.0
        %194 = vmatpush1.msra.mxu0 0.0
        %195 = vmatprep.subr.mxu0 0.0
        %196 = vmatpush1.msra.mxu0 0.0
        %197 = vmatprep.subr.mxu0 0.0
        %198 = vmatpush1.msra.mxu0 0.0
        %199 = vmatprep.subr.mxu0 0.0
        %200 = vmatpush1.msra.mxu0 0.0
        %201 = vmatprep.subr.mxu0 0.0
        %202 = vmatpush1.msra.mxu0 0.0
        %203 = vmatprep.subr.mxu0 0.0
        %204 = vmatpush1.msra.mxu0 0.0
        %205 = vmatprep.subr.mxu0 0.0
        %206 = vmatpush1.msra.mxu0 0.0
        %207 = vmatprep.subr.mxu0 0.0
        %208 = vmatpush1.msra.mxu0 0.0
        %209 = vmatprep.subr.mxu0 0.0
        %210 = vmatpush1.msra.mxu0 0.0
        %211 = vmatprep.subr.mxu0 0.0
        %212 = vmatpush1.msra.mxu0 0.0
        %213 = vmatprep.subr.mxu0 0.0
        %214 = vmatpush1.msra.mxu0 0.0
        %215 = vmatprep.subr.mxu0 0.0
        %216 = vmatpush1.msra.mxu0 0.0
        %217 = vmatprep.subr.mxu0 0.0
        %218 = vmatpush1.msra.mxu0 0.0
        %219 = vmatprep.subr.mxu0 0.0
        %220 = vmatpush1.msra.mxu0 0.0
        %221 = vmatprep.subr.mxu0 0.0
        %222 = vmatpush1.msra.mxu0 0.0
        %223 = vmatprep.subr.mxu0 0.0
        %224 = vmatpush1.msra.mxu0 0.0
        %225 = vmatprep.subr.mxu0 0.0
        %226 = vmatpush1.msra.mxu0 0.0
        %227 = vmatprep.subr.mxu0 0.0
        %228 = vmatpush1.msra.mxu0 0.0
        %229 = vmatprep.subr.mxu0 0.0
        %230 = vmatpush1.msra.mxu0 0.0
        %231 = vmatprep.subr.mxu0 0.0
        %232 = vmatpush1.msra.mxu0 0.0
        %233 = vmatprep.subr.mxu0 0.0
        %234 = vmatpush1.msra.mxu0 0.0
        %235 = vmatprep.subr.mxu0 0.0
        %236 = vmatpush1.msra.mxu0 0.0
        %237 = vmatprep.subr.mxu0 0.0
        %238 = vmatpush1.msra.mxu0 0.0
        %239 = vmatprep.subr.mxu0 0.0
        %240 = vmatpush1.msra.mxu0 0.0
        %241 = vmatprep.subr.mxu0 0.0
        %242 = vmatpush1.msra.mxu0 0.0
        %243 = vmatprep.subr.mxu0 0.0
        %244 = vmatpush1.msra.mxu0 0.0
        %245 = vmatprep.subr.mxu0 0.0
        %246 = vmatpush1.msra.mxu0 0.0
        %247 = vmatprep.subr.mxu0 0.0
        %248 = vmatpush1.msra.mxu0 0.0
        %249 = vmatprep.mubr.f32.mxu0 0.0
        %250 = vmatmul.mubr.f32.gmra.mrb[0].mxu0 %v179
        %v251 = vpop.f32.mrb[0].mxu0
        %v252 = vadd.f32 0.0, %v251
        %v253 = vpop.f32.mrb[0].mxu0
        %254 = vdwg.mxu0
        %vm255 = vcmask 261120
        %256 = vst.msk [vmem:[%s173] sm:$0xff] %vm255, %v252
        %s257 = sand.u32 %s75, 1
        %s258 = scalar_lea.sflag [#allocation4], %s257
        %s259 = sand.u32 %s75, 1
        %s260 = smul.addr %s259, 8
        %s261 = scalar_lea.vmem [#allocation7], %s260
        // Predicated region
        $region37: #{tpu_custom_call.1} parent=27 // pred_check
          %p262 = pneg %p85
        $region38: #{tpu_custom_call.1} parent=27 // pred_check_branch
          %264 = sbr.rel (%p262) target = $region40
        $region39: #{tpu_custom_call.1} parent=27 // pred_region
          %s266 = ssub.s32 128, 128
          %267 = vsyncadd %s258, %s266
          %s268 = smul.addr %s20, 128
          %s269 = scalar_lea.hbm %s2, %s268
          %s271 = sshll.u32 %s261, 4
          %s272 = int_to_ptr.vmem [resolvable:$true] %s271
          %274 = dma.vmem_to_hbm [thread:$0]  %s272, 128, %s269, %s258
        $region40: #{tpu_custom_call.1} parent=27 // pred_fallthru
          _
      $region28: #{tpu_custom_call.1} parent=5 // pred_fallthru
        _
      %p275 = scmp.le.s32.totalorder 2, %s15
      // Predicated region
      $region41: #{tpu_custom_call.1} parent=5 // pred_check
        %p276 = pneg %p275
      $region42: #{tpu_custom_call.1} parent=5 // pred_check_branch
        %278 = sbr.rel (%p276) target = $region44
      $region43: #{tpu_custom_call.1} parent=5 // pred_region
        %s279 = ssub.s32 %s15, 2
        // Predicated region
        $region45: #{tpu_custom_call.1} parent=43 // pred_check
          %p280 = pneg %p91
        $region46: #{tpu_custom_call.1} parent=43 // pred_check_branch
          %282 = sbr.rel (%p280) target = $region48
        $region47: #{tpu_custom_call.1} parent=43 // pred_region
          %s283 = sand.u32 %s76, 1
          %s284 = scalar_lea.sflag [#allocation4], %s283
          %s285 = sand.u32 %s76, 1
          %s286 = smul.addr %s285, 8
          %s287 = scalar_lea.vmem [#allocation7], %s286
          %288 = dma.done %s284, 128
        $region48: #{tpu_custom_call.1} parent=43 // pred_fallthru
          _
      $region44: #{tpu_custom_call.1} parent=5 // pred_fallthru
        _
    $region6: #{tpu_custom_call.1} parent=1 // loop_footer
      %s19 = sadd.s32 1, %s15
    $region7: #{tpu_custom_call.1} parent=1 // loop_footer_branch
      %14 = sbr.rel target = $region3
    $region8: #{tpu_custom_call.1} parent=1 // loop_exit
      _
    %289 = vsyncpa [#allocation3], 1
    %s290 = scalar_lea.sflag [#allocation3], 1
    %291 = vsyncpa %s290, 1
    %292 = vsyncpa [#allocation6], 1
    %293 = vsyncpa [#allocation4], 1
    %s294 = scalar_lea.sflag [#allocation4], 1
    %295 = vsyncpa %s294, 1

</llo_original>
